<compile_context>
chip_gen: v5e
topology: v5e:2x2
jax: 0.10.0
libtpu: 0.0.40
codegen_flags: <defaults>
</compile_context>

<pallas_src>
import functools
import math

import jax
import jax.numpy as jnp
from jax.experimental import pallas as pl
from jax.experimental.pallas import tpu as pltpu


def _dist_pool_kernel(data_ref, out_ref, *, beta, sample_points):
    """One grid step handles `Bt` batch elements.

    data_ref: (Bt, N, F) VMEM  -- instances x features (F on the lane axis)
    out_ref:  (Bt, K, F) VMEM  -- per-feature bin histogram (lane-dense in F)
    """
    data = data_ref[...]                                   # (Bt, N, F) f32

    # Per-bin pass: everything stays (Bt, N, F) lane-dense; the K bin centers
    # are compile-time scalars, so no (..., K) broadcast ever exists.
    # (alfa is omitted on purpose: it cancels in the normalization below.)
    for k, s_k in enumerate(sample_points):
        diff = s_k - data                                  # (Bt, N, F)
        e = jnp.exp(beta * (diff * diff))                  # EUP, full lanes
        out_ref[:, k, :] = jnp.sum(e, axis=1)              # sum over instances

    hist = out_ref[...]                                    # (Bt, K, F)
    norm = jnp.sum(hist, axis=1, keepdims=True)            # (Bt, 1, F)
    inv = pl.reciprocal(norm, approx=False)                # once per feature
    out_ref[...] = hist * inv


def distribution_pooling_filter(data, num_bins=11, sigma=0.1):
    """JAX/Pallas equivalent of DistributionPoolingFilterBase.forward.

    data: (batch, num_instances, num_features) float32
    returns: (batch, num_features, num_bins) float32  (same as PyTorch module)
    """
    data = data.astype(jnp.float32)
    batch, num_instances, num_features = data.shape

    beta = -1.0 / (2.0 * sigma ** 2)
    if num_bins > 1:
        # torch.linspace(0, 1, num_bins) as compile-time Python scalars.
        sample_points = tuple(k / (num_bins - 1) for k in range(num_bins))
    else:
        sample_points = (0.0,)

    # ---- choose Bt: batch elements per grid step ----------------------------
    # Keep the (Bt, N, F) data tile around ~2 MiB so double-buffered input +
    # output tiles stay far below v7x's 64 MiB VMEM, while amortizing the
    # per-grid-step overhead for small bags.
    per_batch_bytes = num_instances * num_features * 4
    bt_max = max(1, (2 * 1024 * 1024) // per_batch_bytes)
    # Keep at least 2 grid steps (when batch >= 2) so both v7x TensorCores
    # have work; on v5e/v6e this only costs one extra cheap grid iteration.
    bt_cap = max(1, min(bt_max, batch // 2)) if batch >= 2 else 1
    bt = 1
    for d in range(1, batch + 1):
        if batch % d == 0 and d <= bt_cap:
            bt = d

    kernel = functools.partial(_dist_pool_kernel, beta=beta,
                               sample_points=sample_points)

    out_kf = pl.pallas_call(
        kernel,
        out_shape=jax.ShapeDtypeStruct((batch, num_bins, num_features),
                                       jnp.float32),
        grid=(batch // bt,),
        in_specs=[
            # data: Bt batch elements per grid step, full (N, F) extent.
            pl.BlockSpec((bt, num_instances, num_features),
                         lambda b: (b, 0, 0)),
        ],
        out_specs=pl.BlockSpec((bt, num_bins, num_features),
                               lambda b: (b, 0, 0)),
        compiler_params=pltpu.CompilerParams(
            dimension_semantics=("parallel",)),
    )(data)

    # PyTorch module returns (B, F, num_bins); transpose once in the wrapper so
    # the kernel's output stays lane-dense (features on the last axis).
    return jnp.transpose(out_kf, (0, 2, 1))


def _reference(data, num_bins=11, sigma=0.1):
    """Pure-JAX reference mirroring the PyTorch forward, for validation."""
    alfa = 1.0 / math.sqrt(2.0 * math.pi * sigma ** 2)
    beta = -1.0 / (2.0 * sigma ** 2)
    sp = jnp.linspace(0.0, 1.0, num_bins, dtype=jnp.float32)
    diff = sp[None, None, None, :] - data[..., None]          # (B, N, F, K)
    result = alfa * jnp.exp(beta * diff ** 2)
    out_un = jnp.sum(result, axis=1)                          # (B, F, K)
    norm = jnp.sum(out_un, axis=2, keepdims=True)             # (B, F, 1)
    return out_un / norm


if __name__ == "__main__":
    # Small deterministic example: 2 bags, 8 instances, 32 features, 11 bins.
    batch, num_instances, num_features, num_bins, sigma = 2, 8, 32, 11, 0.1

    key = jax.random.PRNGKey(0)
    # Instance features in [0, 1], like the MIL post-sigmoid features.
    data = jax.random.uniform(key, (batch, num_instances, num_features),
                              dtype=jnp.float32)

    out = distribution_pooling_filter(data, num_bins=num_bins, sigma=sigma)
    out = jax.block_until_ready(out)

    ref = _reference(data, num_bins=num_bins, sigma=sigma)
    assert out.shape == (batch, num_features, num_bins)
    assert jnp.allclose(out, ref, atol=1e-5, rtol=1e-5), "mismatch vs reference"

    print("KERNEL_OK")
</pallas_src>

<mosaic_0001>
module attributes {stable_mosaic.version = 11 : i64} {
  func.func @_dist_pool_kernel(%arg0: i32, %arg1: memref<1x8x32xf32, #tpu.memory_space<vmem>>, %arg2: memref<1x11x32xf32, #tpu.memory_space<vmem>>) attributes {dimension_semantics = [#tpu.dimension_semantics<parallel>], iteration_bounds = array<i64: 2>, scalar_prefetch = 0 : i64, scratch_operands = 0 : i64, tpu.core_type = #tpu.core_type<tc>, window_params = [{transform_indices = @transform_0, window_bounds = array<i64: 1, 8, 32>}, {transform_indices = @transform_1, window_bounds = array<i64: 1, 11, 32>}]} {
    %c0 = arith.constant 0 : index
    %c0_0 = arith.constant 0 : index
    %c0_1 = arith.constant 0 : index
    %0 = vector.load %arg1[%c0, %c0_0, %c0_1] : memref<1x8x32xf32, #tpu.memory_space<vmem>>, vector<1x8x32xf32>
    %cst = arith.constant 0.000000e+00 : f32
    %1 = vector.broadcast %cst : f32 to vector<1x8x32xf32>
    %2 = arith.subf %1, %0 : vector<1x8x32xf32>
    %3 = arith.mulf %2, %2 : vector<1x8x32xf32>
    %cst_2 = arith.constant -5.000000e+01 : f32
    %4 = vector.broadcast %cst_2 : f32 to vector<1x8x32xf32>
    %5 = arith.mulf %4, %3 : vector<1x8x32xf32>
    %6 = math.exp %5 : vector<1x8x32xf32>
    %cst_3 = arith.constant dense<0.000000e+00> : vector<1x32xf32>
    %7 = vector.multi_reduction <add>, %6, %cst_3 [1] : vector<1x8x32xf32> to vector<1x32xf32>
    %c0_4 = arith.constant 0 : index
    %c0_5 = arith.constant 0 : index
    %c0_6 = arith.constant 0 : index
    %8 = vector.load %arg2[%c0_4, %c0_5, %c0_6] : memref<1x11x32xf32, #tpu.memory_space<vmem>>, vector<1x1x32xf32>
    %9 = vector.shape_cast %8 : vector<1x1x32xf32> to vector<1x32xf32>
    %10 = vector.shape_cast %7 : vector<1x32xf32> to vector<1x1x32xf32>
    tpu.vector_store %arg2[%c0_4, %c0_5, %c0_6], %10 {strides = array<i32>} : memref<1x11x32xf32, #tpu.memory_space<vmem>>, vector<1x1x32xf32>,
    %cst_7 = arith.constant 1.000000e-01 : f32
    %11 = vector.broadcast %cst_7 : f32 to vector<1x8x32xf32>
    %12 = arith.subf %11, %0 : vector<1x8x32xf32>
    %13 = arith.mulf %12, %12 : vector<1x8x32xf32>
    %cst_8 = arith.constant -5.000000e+01 : f32
    %14 = vector.broadcast %cst_8 : f32 to vector<1x8x32xf32>
    %15 = arith.mulf %14, %13 : vector<1x8x32xf32>
    %16 = math.exp %15 : vector<1x8x32xf32>
    %cst_9 = arith.constant dense<0.000000e+00> : vector<1x32xf32>
    %17 = vector.multi_reduction <add>, %16, %cst_9 [1] : vector<1x8x32xf32> to vector<1x32xf32>
    %c0_10 = arith.constant 0 : index
    %c1 = arith.constant 1 : index
    %c0_11 = arith.constant 0 : index
    %18 = vector.load %arg2[%c0_10, %c1, %c0_11] : memref<1x11x32xf32, #tpu.memory_space<vmem>>, vector<1x1x32xf32>
    %19 = vector.shape_cast %18 : vector<1x1x32xf32> to vector<1x32xf32>
    %20 = vector.shape_cast %17 : vector<1x32xf32> to vector<1x1x32xf32>
    tpu.vector_store %arg2[%c0_10, %c1, %c0_11], %20 {strides = array<i32>} : memref<1x11x32xf32, #tpu.memory_space<vmem>>, vector<1x1x32xf32>,
    %cst_12 = arith.constant 2.000000e-01 : f32
    %21 = vector.broadcast %cst_12 : f32 to vector<1x8x32xf32>
    %22 = arith.subf %21, %0 : vector<1x8x32xf32>
    %23 = arith.mulf %22, %22 : vector<1x8x32xf32>
    %cst_13 = arith.constant -5.000000e+01 : f32
    %24 = vector.broadcast %cst_13 : f32 to vector<1x8x32xf32>
    %25 = arith.mulf %24, %23 : vector<1x8x32xf32>
    %26 = math.exp %25 : vector<1x8x32xf32>
    %cst_14 = arith.constant dense<0.000000e+00> : vector<1x32xf32>
    %27 = vector.multi_reduction <add>, %26, %cst_14 [1] : vector<1x8x32xf32> to vector<1x32xf32>
    %c0_15 = arith.constant 0 : index
    %c2 = arith.constant 2 : index
    %c0_16 = arith.constant 0 : index
    %28 = vector.load %arg2[%c0_15, %c2, %c0_16] : memref<1x11x32xf32, #tpu.memory_space<vmem>>, vector<1x1x32xf32>
    %29 = vector.shape_cast %28 : vector<1x1x32xf32> to vector<1x32xf32>
    %30 = vector.shape_cast %27 : vector<1x32xf32> to vector<1x1x32xf32>
    tpu.vector_store %arg2[%c0_15, %c2, %c0_16], %30 {strides = array<i32>} : memref<1x11x32xf32, #tpu.memory_space<vmem>>, vector<1x1x32xf32>,
    %cst_17 = arith.constant 3.000000e-01 : f32
    %31 = vector.broadcast %cst_17 : f32 to vector<1x8x32xf32>
    %32 = arith.subf %31, %0 : vector<1x8x32xf32>
    %33 = arith.mulf %32, %32 : vector<1x8x32xf32>
    %cst_18 = arith.constant -5.000000e+01 : f32
    %34 = vector.broadcast %cst_18 : f32 to vector<1x8x32xf32>
    %35 = arith.mulf %34, %33 : vector<1x8x32xf32>
    %36 = math.exp %35 : vector<1x8x32xf32>
    %cst_19 = arith.constant dense<0.000000e+00> : vector<1x32xf32>
    %37 = vector.multi_reduction <add>, %36, %cst_19 [1] : vector<1x8x32xf32> to vector<1x32xf32>
    %c0_20 = arith.constant 0 : index
    %c3 = arith.constant 3 : index
    %c0_21 = arith.constant 0 : index
    %38 = vector.load %arg2[%c0_20, %c3, %c0_21] : memref<1x11x32xf32, #tpu.memory_space<vmem>>, vector<1x1x32xf32>
    %39 = vector.shape_cast %38 : vector<1x1x32xf32> to vector<1x32xf32>
    %40 = vector.shape_cast %37 : vector<1x32xf32> to vector<1x1x32xf32>
    tpu.vector_store %arg2[%c0_20, %c3, %c0_21], %40 {strides = array<i32>} : memref<1x11x32xf32, #tpu.memory_space<vmem>>, vector<1x1x32xf32>,
    %cst_22 = arith.constant 4.000000e-01 : f32
    %41 = vector.broadcast %cst_22 : f32 to vector<1x8x32xf32>
    %42 = arith.subf %41, %0 : vector<1x8x32xf32>
    %43 = arith.mulf %42, %42 : vector<1x8x32xf32>
    %cst_23 = arith.constant -5.000000e+01 : f32
    %44 = vector.broadcast %cst_23 : f32 to vector<1x8x32xf32>
    %45 = arith.mulf %44, %43 : vector<1x8x32xf32>
    %46 = math.exp %45 : vector<1x8x32xf32>
    %cst_24 = arith.constant dense<0.000000e+00> : vector<1x32xf32>
    %47 = vector.multi_reduction <add>, %46, %cst_24 [1] : vector<1x8x32xf32> to vector<1x32xf32>
    %c0_25 = arith.constant 0 : index
    %c4 = arith.constant 4 : index
    %c0_26 = arith.constant 0 : index
    %48 = vector.load %arg2[%c0_25, %c4, %c0_26] : memref<1x11x32xf32, #tpu.memory_space<vmem>>, vector<1x1x32xf32>
    %49 = vector.shape_cast %48 : vector<1x1x32xf32> to vector<1x32xf32>
    %50 = vector.shape_cast %47 : vector<1x32xf32> to vector<1x1x32xf32>
    tpu.vector_store %arg2[%c0_25, %c4, %c0_26], %50 {strides = array<i32>} : memref<1x11x32xf32, #tpu.memory_space<vmem>>, vector<1x1x32xf32>,
    %cst_27 = arith.constant 5.000000e-01 : f32
    %51 = vector.broadcast %cst_27 : f32 to vector<1x8x32xf32>
    %52 = arith.subf %51, %0 : vector<1x8x32xf32>
    %53 = arith.mulf %52, %52 : vector<1x8x32xf32>
    %cst_28 = arith.constant -5.000000e+01 : f32
    %54 = vector.broadcast %cst_28 : f32 to vector<1x8x32xf32>
    %55 = arith.mulf %54, %53 : vector<1x8x32xf32>
    %56 = math.exp %55 : vector<1x8x32xf32>
    %cst_29 = arith.constant dense<0.000000e+00> : vector<1x32xf32>
    %57 = vector.multi_reduction <add>, %56, %cst_29 [1] : vector<1x8x32xf32> to vector<1x32xf32>
    %c0_30 = arith.constant 0 : index
    %c5 = arith.constant 5 : index
    %c0_31 = arith.constant 0 : index
    %58 = vector.load %arg2[%c0_30, %c5, %c0_31] : memref<1x11x32xf32, #tpu.memory_space<vmem>>, vector<1x1x32xf32>
    %59 = vector.shape_cast %58 : vector<1x1x32xf32> to vector<1x32xf32>
    %60 = vector.shape_cast %57 : vector<1x32xf32> to vector<1x1x32xf32>
    tpu.vector_store %arg2[%c0_30, %c5, %c0_31], %60 {strides = array<i32>} : memref<1x11x32xf32, #tpu.memory_space<vmem>>, vector<1x1x32xf32>,
    %cst_32 = arith.constant 6.000000e-01 : f32
    %61 = vector.broadcast %cst_32 : f32 to vector<1x8x32xf32>
    %62 = arith.subf %61, %0 : vector<1x8x32xf32>
    %63 = arith.mulf %62, %62 : vector<1x8x32xf32>
    %cst_33 = arith.constant -5.000000e+01 : f32
    %64 = vector.broadcast %cst_33 : f32 to vector<1x8x32xf32>
    %65 = arith.mulf %64, %63 : vector<1x8x32xf32>
    %66 = math.exp %65 : vector<1x8x32xf32>
    %cst_34 = arith.constant dense<0.000000e+00> : vector<1x32xf32>
    %67 = vector.multi_reduction <add>, %66, %cst_34 [1] : vector<1x8x32xf32> to vector<1x32xf32>
    %c0_35 = arith.constant 0 : index
    %c6 = arith.constant 6 : index
    %c0_36 = arith.constant 0 : index
    %68 = vector.load %arg2[%c0_35, %c6, %c0_36] : memref<1x11x32xf32, #tpu.memory_space<vmem>>, vector<1x1x32xf32>
    %69 = vector.shape_cast %68 : vector<1x1x32xf32> to vector<1x32xf32>
    %70 = vector.shape_cast %67 : vector<1x32xf32> to vector<1x1x32xf32>
    tpu.vector_store %arg2[%c0_35, %c6, %c0_36], %70 {strides = array<i32>} : memref<1x11x32xf32, #tpu.memory_space<vmem>>, vector<1x1x32xf32>,
    %cst_37 = arith.constant 0.699999988 : f32
    %71 = vector.broadcast %cst_37 : f32 to vector<1x8x32xf32>
    %72 = arith.subf %71, %0 : vector<1x8x32xf32>
    %73 = arith.mulf %72, %72 : vector<1x8x32xf32>
    %cst_38 = arith.constant -5.000000e+01 : f32
    %74 = vector.broadcast %cst_38 : f32 to vector<1x8x32xf32>
    %75 = arith.mulf %74, %73 : vector<1x8x32xf32>
    %76 = math.exp %75 : vector<1x8x32xf32>
    %cst_39 = arith.constant dense<0.000000e+00> : vector<1x32xf32>
    %77 = vector.multi_reduction <add>, %76, %cst_39 [1] : vector<1x8x32xf32> to vector<1x32xf32>
    %c0_40 = arith.constant 0 : index
    %c7 = arith.constant 7 : index
    %c0_41 = arith.constant 0 : index
    %78 = vector.load %arg2[%c0_40, %c7, %c0_41] : memref<1x11x32xf32, #tpu.memory_space<vmem>>, vector<1x1x32xf32>
    %79 = vector.shape_cast %78 : vector<1x1x32xf32> to vector<1x32xf32>
    %80 = vector.shape_cast %77 : vector<1x32xf32> to vector<1x1x32xf32>
    tpu.vector_store %arg2[%c0_40, %c7, %c0_41], %80 {strides = array<i32>} : memref<1x11x32xf32, #tpu.memory_space<vmem>>, vector<1x1x32xf32>,
    %cst_42 = arith.constant 8.000000e-01 : f32
    %81 = vector.broadcast %cst_42 : f32 to vector<1x8x32xf32>
    %82 = arith.subf %81, %0 : vector<1x8x32xf32>
    %83 = arith.mulf %82, %82 : vector<1x8x32xf32>
    %cst_43 = arith.constant -5.000000e+01 : f32
    %84 = vector.broadcast %cst_43 : f32 to vector<1x8x32xf32>
    %85 = arith.mulf %84, %83 : vector<1x8x32xf32>
    %86 = math.exp %85 : vector<1x8x32xf32>
    %cst_44 = arith.constant dense<0.000000e+00> : vector<1x32xf32>
    %87 = vector.multi_reduction <add>, %86, %cst_44 [1] : vector<1x8x32xf32> to vector<1x32xf32>
    %c0_45 = arith.constant 0 : index
    %c8 = arith.constant 8 : index
    %c0_46 = arith.constant 0 : index
    %88 = vector.load %arg2[%c0_45, %c8, %c0_46] : memref<1x11x32xf32, #tpu.memory_space<vmem>>, vector<1x1x32xf32>
    %89 = vector.shape_cast %88 : vector<1x1x32xf32> to vector<1x32xf32>
    %90 = vector.shape_cast %87 : vector<1x32xf32> to vector<1x1x32xf32>
    tpu.vector_store %arg2[%c0_45, %c8, %c0_46], %90 {strides = array<i32>} : memref<1x11x32xf32, #tpu.memory_space<vmem>>, vector<1x1x32xf32>,
    %cst_47 = arith.constant 0.899999976 : f32
    %91 = vector.broadcast %cst_47 : f32 to vector<1x8x32xf32>
    %92 = arith.subf %91, %0 : vector<1x8x32xf32>
    %93 = arith.mulf %92, %92 : vector<1x8x32xf32>
    %cst_48 = arith.constant -5.000000e+01 : f32
    %94 = vector.broadcast %cst_48 : f32 to vector<1x8x32xf32>
    %95 = arith.mulf %94, %93 : vector<1x8x32xf32>
    %96 = math.exp %95 : vector<1x8x32xf32>
    %cst_49 = arith.constant dense<0.000000e+00> : vector<1x32xf32>
    %97 = vector.multi_reduction <add>, %96, %cst_49 [1] : vector<1x8x32xf32> to vector<1x32xf32>
    %c0_50 = arith.constant 0 : index
    %c9 = arith.constant 9 : index
    %c0_51 = arith.constant 0 : index
    %98 = vector.load %arg2[%c0_50, %c9, %c0_51] : memref<1x11x32xf32, #tpu.memory_space<vmem>>, vector<1x1x32xf32>
    %99 = vector.shape_cast %98 : vector<1x1x32xf32> to vector<1x32xf32>
    %100 = vector.shape_cast %97 : vector<1x32xf32> to vector<1x1x32xf32>
    tpu.vector_store %arg2[%c0_50, %c9, %c0_51], %100 {strides = array<i32>} : memref<1x11x32xf32, #tpu.memory_space<vmem>>, vector<1x1x32xf32>,
    %cst_52 = arith.constant 1.000000e+00 : f32
    %101 = vector.broadcast %cst_52 : f32 to vector<1x8x32xf32>
    %102 = arith.subf %101, %0 : vector<1x8x32xf32>
    %103 = arith.mulf %102, %102 : vector<1x8x32xf32>
    %cst_53 = arith.constant -5.000000e+01 : f32
    %104 = vector.broadcast %cst_53 : f32 to vector<1x8x32xf32>
    %105 = arith.mulf %104, %103 : vector<1x8x32xf32>
    %106 = math.exp %105 : vector<1x8x32xf32>
    %cst_54 = arith.constant dense<0.000000e+00> : vector<1x32xf32>
    %107 = vector.multi_reduction <add>, %106, %cst_54 [1] : vector<1x8x32xf32> to vector<1x32xf32>
    %c0_55 = arith.constant 0 : index
    %c10 = arith.constant 10 : index
    %c0_56 = arith.constant 0 : index
    %108 = vector.load %arg2[%c0_55, %c10, %c0_56] : memref<1x11x32xf32, #tpu.memory_space<vmem>>, vector<1x1x32xf32>
    %109 = vector.shape_cast %108 : vector<1x1x32xf32> to vector<1x32xf32>
    %110 = vector.shape_cast %107 : vector<1x32xf32> to vector<1x1x32xf32>
    tpu.vector_store %arg2[%c0_55, %c10, %c0_56], %110 {strides = array<i32>} : memref<1x11x32xf32, #tpu.memory_space<vmem>>, vector<1x1x32xf32>,
    %c0_57 = arith.constant 0 : index
    %c0_58 = arith.constant 0 : index
    %c0_59 = arith.constant 0 : index
    %111 = vector.load %arg2[%c0_57, %c0_58, %c0_59] : memref<1x11x32xf32, #tpu.memory_space<vmem>>, vector<1x11x32xf32>
    %cst_60 = arith.constant dense<0.000000e+00> : vector<1x32xf32>
    %112 = vector.multi_reduction <add>, %111, %cst_60 [1] : vector<1x11x32xf32> to vector<1x32xf32>
    %113 = vector.shape_cast %112 : vector<1x32xf32> to vector<1x1x32xf32>
    %114 = tpu.reciprocal %113 : vector<1x1x32xf32> -> vector<1x1x32xf32>
    %115 = vector.broadcast %114 : vector<1x1x32xf32> to vector<1x11x32xf32>
    %116 = arith.mulf %111, %115 : vector<1x11x32xf32>
    %c0_61 = arith.constant 0 : index
    %c0_62 = arith.constant 0 : index
    %c0_63 = arith.constant 0 : index
    %117 = vector.load %arg2[%c0_61, %c0_62, %c0_63] : memref<1x11x32xf32, #tpu.memory_space<vmem>>, vector<1x11x32xf32>
    tpu.vector_store %arg2[%c0_61, %c0_62, %c0_63], %116 {strides = array<i32>} : memref<1x11x32xf32, #tpu.memory_space<vmem>>, vector<1x11x32xf32>,
    return
  }
  func.func @transform_0(%arg0: i32) -> (i32, i32, i32) {
    %c0_i32 = arith.constant 0 : i32
    %c0_i32_0 = arith.constant 0 : i32
    %c0_i32_1 = arith.constant 0 : i32
    return %arg0, %c0_i32, %c0_i32_0 : i32, i32, i32
  }
  func.func @transform_1(%arg0: i32) -> (i32, i32, i32) {
    %c0_i32 = arith.constant 0 : i32
    %c0_i32_0 = arith.constant 0 : i32
    %c0_i32_1 = arith.constant 0 : i32
    return %arg0, %c0_i32, %c0_i32_0 : i32, i32, i32
  }
}

</mosaic_0001>

<llo_original>
// kernel: tpu_custom_call.1
$region0: #{tpu_custom_call.1}
  #allocation0 [shape = 'u32[]', space=smem, size = 0x4, offset = 0x4, fixed_abs, tag = 'smem constant byte address 0x4 - core index']
  #allocation1 [shape = 'u32[72,128]{1,0:T(1,128)}', space=vmem, size = 0x9000, scoped, tag = 'internal scratch']
  %s0 = inlined_call_operand.hbm [shape: f32[2,8,32], index: 0, kind: input, shape index: {}]
  %s1 = inlined_call_operand.vmem [shape: f32[2,11,32], index: 1, kind: output, shape index: {}]
  %s2 = sld [smem:[#allocation0]]
  $region41: #{tpu_custom_call.1} parent=0
    _
  %s4 = ssub.s32 1, %s2
  %s5 = scalar_select 0, %s4, %s2
  $region1: #{tpu_custom_call.1} parent=0
    #allocation2 [shape = 'u8[8192]{0}', space=vmem, size = 0x2000, scoped, tag = 'input window, operand 0']
    #allocation3 [shape = 's32[2]{0}', space=sflag, size = 0x8, scoped, tag = 'scoped memory for tpu_custom_call.1']
    %6 = vsyncpa [#allocation3], 0
    %s7 = scalar_lea.sflag [#allocation3], 1
    %8 = vsyncpa %s7, 0
    loop: start=0, step=1, limit=4
    $region2: #{tpu_custom_call.1} parent=1 // loop_pre_header
      _
    $region3: #{tpu_custom_call.1} parent=1 // loop_header
      %s10 = sphi 0, %s14
      %p11 = scmp.ge.s32.totalorder %s10, 4
      %s20 = sphi 0, %s22
      %s23 = sphi 0, %s20
      %s24 = sphi 0, %s23
      %s40 = sphi 0, %s24
      %s46 = sphi 0, %s48
      %s49 = sphi 0, %s46
      %s50 = sphi 0, %s49
      %s66 = sphi 0, %s50
    $region4: #{tpu_custom_call.1} parent=1 // loop_header_branch
      %13 = sbr.rel (%p11) target = $region8
    $region5: #{tpu_custom_call.1} parent=1 // loop_body
      %s15 = ssub.s32 %s10, 1
      %s16 = ssub.s32 %s10, 2
      %s17 = sadd.s32 %s10, 1
      %s18 = ssub.s32 %s10, %s17
      %p19 = scmp.eq.s32.totalorder %s18, 0
      %s21 = sadd.s32 %s20, 1
      %s22 = scalar_select %p19, %s20, %s21
      %p25 = pneg %p19
      %p26 = scmp.eq.s32.totalorder %s10, 1
      %p27 = por %p25, %p26
      %p28 = scmp.ne.s32.totalorder %s20, %s23
      %p29 = scmp.eq.s32.totalorder %s10, 0
      %p30 = por %p28, %p29
      %p31 = scmp.ne.s32.totalorder %s20, %s23
      %p32 = scmp.eq.s32.totalorder %s15, 1
      %p33 = por %p31, %p32
      %p34 = scmp.ne.s32.totalorder %s23, %s24
      %p35 = scmp.eq.s32.totalorder %s15, 0
      %p36 = por %p34, %p35
      %p37 = scmp.ne.s32.totalorder %s23, %s24
      %p38 = scmp.eq.s32.totalorder %s16, 1
      %p39 = por %p37, %p38
      %p41 = scmp.ne.s32.totalorder %s24, %s40
      %p42 = scmp.eq.s32.totalorder %s16, 0
      %p43 = por %p41, %p42
      %s44 = ssub.s32 %s10, %s17
      %p45 = scmp.eq.s32.totalorder %s44, 0
      %s47 = sadd.s32 %s46, 1
      %s48 = scalar_select %p45, %s46, %s47
      %p51 = pneg %p45
      %p52 = scmp.eq.s32.totalorder %s10, 1
      %p53 = por %p51, %p52
      %p54 = scmp.ne.s32.totalorder %s46, %s49
      %p55 = scmp.eq.s32.totalorder %s10, 0
      %p56 = por %p54, %p55
      %p57 = scmp.ne.s32.totalorder %s46, %s49
      %p58 = scmp.eq.s32.totalorder %s15, 1
      %p59 = por %p57, %p58
      %p60 = scmp.ne.s32.totalorder %s49, %s50
      %p61 = scmp.eq.s32.totalorder %s15, 0
      %p62 = por %p60, %p61
      %p63 = scmp.ne.s32.totalorder %s49, %s50
      %p64 = scmp.eq.s32.totalorder %s16, 1
      %p65 = por %p63, %p64
      %p67 = scmp.ne.s32.totalorder %s50, %s66
      %p68 = scmp.eq.s32.totalorder %s16, 0
      %p69 = por %p67, %p68
      %p70 = scmp.le.s32.totalorder 1, %s10
      %p71 = scmp.lt.s32.totalorder %s10, 3
      %p72 = pnand %p70, %p71
      %p73 = pneg %p72
      // Predicated region
      $region9: #{tpu_custom_call.1} parent=5 // pred_check
        _
      $region10: #{tpu_custom_call.1} parent=5 // pred_check_branch
        %75 = sbr.rel (%p72) target = $region12
      $region11: #{tpu_custom_call.1} parent=5 // pred_region
        %s76 = ssub.s32 %s10, 1
      $region12: #{tpu_custom_call.1} parent=5 // pred_fallthru
        _
      %p77 = scmp.lt.s32.totalorder %s10, 2
      // Predicated region
      $region13: #{tpu_custom_call.1} parent=5 // pred_check
        %p78 = pneg %p77
      $region14: #{tpu_custom_call.1} parent=5 // pred_check_branch
        %80 = sbr.rel (%p78) target = $region16
      $region15: #{tpu_custom_call.1} parent=5 // pred_region
        // Predicated region
        $region17: #{tpu_custom_call.1} parent=15 // pred_check
          %p81 = pneg %p30
        $region18: #{tpu_custom_call.1} parent=15 // pred_check_branch
          %83 = sbr.rel (%p81) target = $region20
        $region19: #{tpu_custom_call.1} parent=15 // pred_region
          %s84 = sand.u32 %s20, 1
          %s85 = scalar_lea.sflag [#allocation3], %s84
          %s86 = sand.u32 %s20, 1
          %s87 = smul.addr %s86, 8
          %s88 = scalar_lea.vmem [#allocation2], %s87
          %90 = vsyncadd %s85, 0
          %s91 = smul.addr %s10, 8
          %s92 = scalar_lea.hbm %s0, %s91
          %s94 = sshll.u32 %s92, 4
          %s95 = int_to_ptr.hbm [resolvable:$true] %s94
          %s96 = sshll.u32 %s88, 4
          %s97 = int_to_ptr.vmem [resolvable:$true] %s96
          %99 = dma.hbm_to_vmem [thread:$0]  %s95, 128, %s97, %s85
        $region20: #{tpu_custom_call.1} parent=15 // pred_fallthru
          _
      $region16: #{tpu_custom_call.1} parent=5 // pred_fallthru
        _
      %p100 = scmp.le.s32.totalorder 1, %s10
      %p101 = scmp.lt.s32.totalorder %s10, 3
      %p102 = pnand %p100, %p101
      %p103 = pneg %p102
      // Predicated region
      $region21: #{tpu_custom_call.1} parent=5 // pred_check
        _
      $region22: #{tpu_custom_call.1} parent=5 // pred_check_branch
        %105 = sbr.rel (%p102) target = $region24
      $region23: #{tpu_custom_call.1} parent=5 // pred_region
        %s106 = ssub.s32 %s10, 1
        %s107 = sand.u32 %s23, 1
        %s108 = scalar_lea.sflag [#allocation3], %s107
        %s109 = sand.u32 %s23, 1
        %s110 = smul.addr %s109, 8
        %s111 = scalar_lea.vmem [#allocation2], %s110
        // Predicated region
        $region25: #{tpu_custom_call.1} parent=23 // pred_check
          %p112 = pneg %p36
        $region26: #{tpu_custom_call.1} parent=23 // pred_check_branch
          %114 = sbr.rel (%p112) target = $region28
        $region27: #{tpu_custom_call.1} parent=23 // pred_region
          %116 = dma.done %s108, 128
        $region28: #{tpu_custom_call.1} parent=23 // pred_fallthru
          _
        %s117 = sand.u32 %s23, 1
        %s118 = scalar_lea.sflag [#allocation3], %s117
        %s119 = sand.u32 %s23, 1
        %s120 = smul.addr %s119, 8
        %s121 = scalar_lea.vmem [#allocation2], %s120
        %p122 = pneg %p36
        %p123 = pneg %p33
        %p124 = pneg %p62
        %p125 = pneg %p59
        %p126 = scmp.lt.s32.totalorder %s15, 1
        %s127 = scalar_select %p126, %s15, 1
        %s128 = smul.addr %s127, 2
        %s129 = smul.addr %s128, 8
        %s130 = scalar_lea.vmem %s1, %s129
        %p131 = scmp.lt.s32.totalorder %s15, 1
        %s132 = scalar_select %p131, %s15, 1
        %s133 = smul.addr %s132, 2
        %s134 = smul.addr %s133, 8
        %s135 = scalar_lea.vmem %s1, %s134
        %v136 = vld [vmem:[%s111] sm:$0xff]
        %v137 = vsub.f32 0.0, %v136
        %v138 = vmul.f32 %v137, %v137
        %v139 = vmul.f32 %v138, -50.0
        %v140 = vmul.f32 %v139, 1.442695
        %v141 = vpow.pop %v140
        %vm142 = vcmask 261120
        %v143 = vsel %vm142, %v141, 0.0
        %v144 = vrot.slane %v143, 4
        %v145 = vadd.f32 %v143, %v144
        %v146 = vrot.slane %v145, 2
        %v147 = vadd.f32 %v145, %v146
        %v148 = vrot.slane %v147, 1
        %v149 = vadd.f32 %v147, %v148
        %vm150 = vcmask 253952
        %151 = vst.msk [vmem:[%s135] sm:$0x1] %vm150, %v149
        %v152 = vsub.f32 0.1, %v136
        %v153 = vmul.f32 %v152, %v152
        %v154 = vmul.f32 %v153, -50.0
        %v155 = vmul.f32 %v154, 1.442695
        %v156 = vpow.pop %v155
        %v157 = vsel %vm142, %v156, 0.0
        %v158 = vrot.slane %v157, 4
        %v159 = vadd.f32 %v157, %v158
        %v160 = vrot.slane %v159, 2
        %v161 = vadd.f32 %v159, %v160
        %v162 = vrot.slane %v161, 1
        %v163 = vadd.f32 %v161, %v162
        %164 = vst.msk [vmem:[%s135 + $0x1] sm:$0x1] %vm150, %v163
        %v165 = vsub.f32 0.2, %v136
        %v166 = vmul.f32 %v165, %v165
        %v167 = vmul.f32 %v166, -50.0
        %v168 = vmul.f32 %v167, 1.442695
        %v169 = vpow.pop %v168
        %v170 = vsel %vm142, %v169, 0.0
        %v171 = vrot.slane %v170, 4
        %v172 = vadd.f32 %v170, %v171
        %v173 = vrot.slane %v172, 2
        %v174 = vadd.f32 %v172, %v173
        %v175 = vrot.slane %v174, 1
        %v176 = vadd.f32 %v174, %v175
        %177 = vst.msk [vmem:[%s135 + $0x2] sm:$0x1] %vm150, %v176
        %v178 = vsub.f32 0.3, %v136
        %v179 = vmul.f32 %v178, %v178
        %v180 = vmul.f32 %v179, -50.0
        %v181 = vmul.f32 %v180, 1.442695
        %v182 = vpow.pop %v181
        %v183 = vsel %vm142, %v182, 0.0
        %v184 = vrot.slane %v183, 4
        %v185 = vadd.f32 %v183, %v184
        %v186 = vrot.slane %v185, 2
        %v187 = vadd.f32 %v185, %v186
        %v188 = vrot.slane %v187, 1
        %v189 = vadd.f32 %v187, %v188
        %190 = vst.msk [vmem:[%s135 + $0x3] sm:$0x1] %vm150, %v189
        %v191 = vsub.f32 0.4, %v136
        %v192 = vmul.f32 %v191, %v191
        %v193 = vmul.f32 %v192, -50.0
        %v194 = vmul.f32 %v193, 1.442695
        %v195 = vpow.pop %v194
        %v196 = vsel %vm142, %v195, 0.0
        %v197 = vrot.slane %v196, 4
        %v198 = vadd.f32 %v196, %v197
        %v199 = vrot.slane %v198, 2
        %v200 = vadd.f32 %v198, %v199
        %v201 = vrot.slane %v200, 1
        %v202 = vadd.f32 %v200, %v201
        %203 = vst.msk [vmem:[%s135 + $0x4] sm:$0x1] %vm150, %v202
        %v204 = vsub.f32 0.5, %v136
        %v205 = vmul.f32 %v204, %v204
        %v206 = vmul.f32 %v205, -50.0
        %v207 = vmul.f32 %v206, 1.442695
        %v208 = vpow.pop %v207
        %v209 = vsel %vm142, %v208, 0.0
        %v210 = vrot.slane %v209, 4
        %v211 = vadd.f32 %v209, %v210
        %v212 = vrot.slane %v211, 2
        %v213 = vadd.f32 %v211, %v212
        %v214 = vrot.slane %v213, 1
        %v215 = vadd.f32 %v213, %v214
        %216 = vst.msk [vmem:[%s135 + $0x5] sm:$0x1] %vm150, %v215
        %v217 = vsub.f32 0.6, %v136
        %v218 = vmul.f32 %v217, %v217
        %v219 = vmul.f32 %v218, -50.0
        %v220 = vmul.f32 %v219, 1.442695
        %v221 = vpow.pop %v220
        %v222 = vsel %vm142, %v221, 0.0
        %v223 = vrot.slane %v222, 4
        %v224 = vadd.f32 %v222, %v223
        %v225 = vrot.slane %v224, 2
        %v226 = vadd.f32 %v224, %v225
        %v227 = vrot.slane %v226, 1
        %v228 = vadd.f32 %v226, %v227
        %229 = vst.msk [vmem:[%s135 + $0x6] sm:$0x1] %vm150, %v228
        %v230 = vsub.f32 0.7, %v136
        %v231 = vmul.f32 %v230, %v230
        %v232 = vmul.f32 %v231, -50.0
        %v233 = vmul.f32 %v232, 1.442695
        %v234 = vpow.pop %v233
        %v235 = vsel %vm142, %v234, 0.0
        %v236 = vrot.slane %v235, 4
        %v237 = vadd.f32 %v235, %v236
        %v238 = vrot.slane %v237, 2
        %v239 = vadd.f32 %v237, %v238
        %v240 = vrot.slane %v239, 1
        %v241 = vadd.f32 %v239, %v240
        %242 = vst.msk [vmem:[%s135 + $0x7] sm:$0x1] %vm150, %v241
        %v243 = vsub.f32 0.8, %v136
        %v244 = vmul.f32 %v243, %v243
        %v245 = vmul.f32 %v244, -50.0
        %v246 = vmul.f32 %v245, 1.442695
        %v247 = vpow.pop %v246
        %v248 = vsel %vm142, %v247, 0.0
        %v249 = vrot.slane %v248, 4
        %v250 = vadd.f32 %v248, %v249
        %v251 = vrot.slane %v250, 2
        %v252 = vadd.f32 %v250, %v251
        %v253 = vrot.slane %v252, 1
        %v254 = vadd.f32 %v252, %v253
        %255 = vst.msk [vmem:[%s135 + $0x8] sm:$0x1] %vm150, %v254
        %v256 = vsub.f32 0.9, %v136
        %v257 = vmul.f32 %v256, %v256
        %v258 = vmul.f32 %v257, -50.0
        %v259 = vmul.f32 %v258, 1.442695
        %v260 = vpow.pop %v259
        %v261 = vsel %vm142, %v260, 0.0
        %v262 = vrot.slane %v261, 4
        %v263 = vadd.f32 %v261, %v262
        %v264 = vrot.slane %v263, 2
        %v265 = vadd.f32 %v263, %v264
        %v266 = vrot.slane %v265, 1
        %v267 = vadd.f32 %v265, %v266
        %268 = vst.msk [vmem:[%s135 + $0x9] sm:$0x1] %vm150, %v267
        %v269 = vsub.f32 1.0, %v136
        %v270 = vmul.f32 %v269, %v269
        %v271 = vmul.f32 %v270, -50.0
        %v272 = vmul.f32 %v271, 1.442695
        %v273 = vpow.pop %v272
        %v274 = vsel %vm142, %v273, 0.0
        %v275 = vrot.slane %v274, 4
        %v276 = vadd.f32 %v274, %v275
        %v277 = vrot.slane %v276, 2
        %v278 = vadd.f32 %v276, %v277
        %v279 = vrot.slane %v278, 1
        %v280 = vadd.f32 %v278, %v279
        %281 = vst.msk [vmem:[%s135 + $0xa] sm:$0x1] %vm150, %v280
        %v282 = vld [vmem:[%s135] sm:$0xff]
        %v283 = vld [vmem:[%s135 + $0x8] sm:$0x7]
        %v284 = vsel %vm142, %v282, 0.0
        %vm285 = vcmask 256000
        %v286 = vsel %vm285, %v283, 0.0
        %v287 = vadd.f32 %v284, %v286
        %v288 = vrot.slane %v287, 4
        %v289 = vadd.f32 %v287, %v288
        %v290 = vrot.slane %v289, 2
        %v291 = vadd.f32 %v289, %v290
        %v292 = vrot.slane %v291, 1
        %v293 = vadd.f32 %v291, %v292
        %v294 = vrcp.pop %v293
        %v295 = vmul.f32 %v293, %v294
        %v296 = vsub.f32 1.0, %v295
        %v297 = vmul.f32 %v294, %v296
        %v298 = vadd.f32 %v294, %v297
        %vm299 = vweird.f32 %v293
        %vm300 = vweird.f32 %v294
        %vm301 = vmor %vm299, %vm300
        %v302 = vsel %vm301, %v294, %v298
        %v303 = vand.u32 2147483647, %v293
        %vm304 = vcmp.eq.f32.partialorder %v303, 8.507059e+37
        %v305 = vand.u32 %v293, 2147483648
        %v306 = vor.u32 1.1754944e-38, %v305
        %v307 = vsel %vm304, %v306, %v302
        %v308 = vmul.f32 %v282, %v307
        %v309 = vmul.f32 %v283, %v307
        %310 = vst.msk [vmem:[%s135] sm:$0xff] %vm142, %v308
        %311 = vst.msk [vmem:[%s135 + $0x8] sm:$0x7] %vm285, %v309
        %p312 = scmp.lt.s32.totalorder %s15, 1
        %s313 = scalar_select %p312, %s15, 1
        %s314 = smul.addr %s313, 2
        %s315 = smul.addr %s314, 8
        %s316 = scalar_lea.vmem %s1, %s315
        // Predicated region
        $region29: #{tpu_custom_call.1} parent=23 // pred_check
          %p317 = pneg %p59
        $region30: #{tpu_custom_call.1} parent=23 // pred_check_branch
          %319 = sbr.rel (%p317) target = $region32
        $region31: #{tpu_custom_call.1} parent=23 // pred_region
          _
        $region32: #{tpu_custom_call.1} parent=23 // pred_fallthru
          _
      $region24: #{tpu_custom_call.1} parent=5 // pred_fallthru
        _
      %p320 = scmp.le.s32.totalorder 2, %s10
      // Predicated region
      $region33: #{tpu_custom_call.1} parent=5 // pred_check
        %p321 = pneg %p320
      $region34: #{tpu_custom_call.1} parent=5 // pred_check_branch
        %323 = sbr.rel (%p321) target = $region36
      $region35: #{tpu_custom_call.1} parent=5 // pred_region
        %s324 = ssub.s32 %s10, 2
        // Predicated region
        $region37: #{tpu_custom_call.1} parent=35 // pred_check
          %p325 = pneg %p65
        $region38: #{tpu_custom_call.1} parent=35 // pred_check_branch
          %327 = sbr.rel (%p325) target = $region40
        $region39: #{tpu_custom_call.1} parent=35 // pred_region
          %p328 = scmp.lt.s32.totalorder %s16, 1
          %s329 = scalar_select %p328, %s16, 1
          %s330 = smul.addr %s329, 2
          %s331 = smul.addr %s330, 8
          %s332 = scalar_lea.vmem %s1, %s331
        $region40: #{tpu_custom_call.1} parent=35 // pred_fallthru
          _
      $region36: #{tpu_custom_call.1} parent=5 // pred_fallthru
        _
    $region6: #{tpu_custom_call.1} parent=1 // loop_footer
      %s14 = sadd.s32 1, %s10
    $region7: #{tpu_custom_call.1} parent=1 // loop_footer_branch
      %9 = sbr.rel target = $region3
    $region8: #{tpu_custom_call.1} parent=1 // loop_exit
      _
    %333 = vsyncpa [#allocation3], 1
    %s334 = scalar_lea.sflag [#allocation3], 1
    %335 = vsyncpa %s334, 1

</llo_original>
